<compile_context>
chip_gen: v7x
topology: tpu7x:2x2x1
jax: 0.10.0
libtpu: 0.0.40
codegen_flags: <defaults>
</compile_context>

<pallas_src>
import functools

import jax
import jax.numpy as jnp
from jax.experimental import pallas as pl
from jax.experimental.pallas import tpu as pltpu


# ----------------------------- Pallas kernel --------------------------------

def _commnet_kernel(obs_ref, h0_ref,
                    w_enc_ref, b_enc_ref,
                    wih_o_ref, whh_o_ref, brz_o_ref, bin_o_ref, bhn_o_ref,
                    wih_c_ref, whh_c_ref, brz_c_ref, bin_c_ref, bhn_c_ref,
                    w_dec_ref, b_dec_ref,
                    weights_ref, h_out_ref,
                    *, k_rounds: int, n_agents: int):
    f32 = jnp.float32
    bf16 = jnp.bfloat16
    H = h0_ref.shape[1]
    rows = h0_ref.shape[0]
    bpb = rows // n_agents            # batches handled by this grid step (static)
    inv_n = 1.0 / float(n_agents)

    def fused_gru(x, h, wih_ref, whh_ref, brz_ref, bin_ref, bhn_ref):
        # PyTorch GRUCell semantics, gates fused along the lane axis (r|z|n):
        #   r = sigmoid(x@Wir + h@Whr + (bir+bhr))
        #   z = sigmoid(x@Wiz + h@Whz + (biz+bhz))
        #   n = tanh  (x@Win + bin + r * (h@Whn + bhn))
        #   h' = (1 - z) * n + z * h
        gates_h = jnp.dot(h.astype(bf16), whh_ref[...],
                          preferred_element_type=f32)            # (rows, 3H)
        if x is None:                                            # x == 0 exactly
            rz_pre = gates_h[:, :2 * H] + brz_ref[...]
            n_x = bin_ref[...]
        else:
            gates_x = jnp.dot(x.astype(bf16), wih_ref[...],
                              preferred_element_type=f32)        # (rows, 3H)
            rz_pre = gates_x[:, :2 * H] + gates_h[:, :2 * H] + brz_ref[...]
            n_x = gates_x[:, 2 * H:] + bin_ref[...]
        rz = jax.nn.sigmoid(rz_pre)      # one sigmoid over the (rows, 2H) slab
        r = rz[:, :H]
        z = rz[:, H:]
        n = jnp.tanh(n_x + r * (gates_h[:, 2 * H:] + bhn_ref[...]))
        return (1.0 - z) * n + z * h

    # observation encoding + sigmoid
    enc = jax.nn.sigmoid(
        jnp.dot(obs_ref[...].astype(bf16), w_enc_ref[...],
                preferred_element_type=f32) + b_enc_ref[...])

    # f_obs GRU
    h = fused_gru(enc, h0_ref[...], wih_o_ref, whh_o_ref,
                  brz_o_ref, bin_o_ref, bhn_o_ref)
    h_out_ref[...] = h

    # k communication rounds with f_comm GRU (k static -> Python unroll)
    for k in range(k_rounds):
        if k == 0:
            # c == 0: skip the dead x-side matmul entirely
            h = fused_gru(None, h, wih_c_ref, whh_c_ref,
                          brz_c_ref, bin_c_ref, bhn_c_ref)
        else:
            # c_i = (sum over agents in same batch - h_i) / n_agents
            hh = h.reshape(bpb, n_agents, H)
            tot = jnp.sum(hh, axis=1, keepdims=True)             # (bpb, 1, H)
            c = ((tot - hh) * inv_n).reshape(rows, H)
            h = fused_gru(c, h, wih_c_ref, whh_c_ref,
                          brz_c_ref, bin_c_ref, bhn_c_ref)

    # decoding linear (lane-dense padded output, sliced in the wrapper)
    weights_ref[...] = (
        jnp.dot(h.astype(bf16), w_dec_ref[...], preferred_element_type=f32)
        + b_dec_ref[...])


# ------------------------------ wrapper --------------------------------------

def _pick_batches_per_block(batch: int, n_agents: int, max_rows: int) -> int:
    # Largest divisor of `batch` whose row count (bpb * n_agents) is 8-aligned
    # (sublane) and fits the per-step row budget; fall back to the whole batch
    # in a single full-array block (always legal).
    for bpb in range(batch, 0, -1):
        if batch % bpb:
            continue
        rows = bpb * n_agents
        if rows <= max_rows and (rows % 8 == 0 or bpb == batch):
            return bpb
    return batch


def commnet_forward(obs, hidden_state, params, *, n_agents: int, k_rounds: int,
                    max_rows_per_block: int = 512):
    """obs: (batch*n_agents, input_shape); hidden_state reshaped to (-1, H)."""
    f32 = jnp.float32
    bf16 = jnp.bfloat16
    in_dim, H = params["w_enc"].shape
    n_actions = params["w_dec"].shape[1]

    obs = obs.astype(f32)
    h_in = hidden_state.reshape(-1, H).astype(f32)
    N = obs.shape[0]
    batch = N // n_agents
    assert batch * n_agents == N

    bpb = _pick_batches_per_block(batch, n_agents, max_rows_per_block)
    rows_blk = bpb * n_agents
    grid = (batch // bpb,)

    # --- restack GRU gate weights (3,H,H) -> (H,3H), gate order (r|z|n) ------
    def cat_gates(w):                      # bf16 for the MXU
        return jnp.concatenate([w[0], w[1], w[2]], axis=1).astype(bf16)

    def fused_rz_bias(bih, bhh):           # (3,1,H) x2 -> (1, 2H), f32
        return jnp.concatenate([bih[0] + bhh[0], bih[1] + bhh[1]],
                               axis=1).astype(f32)

    wih_o = cat_gates(params["wih_o"]); whh_o = cat_gates(params["whh_o"])
    wih_c = cat_gates(params["wih_c"]); whh_c = cat_gates(params["whh_c"])
    brz_o = fused_rz_bias(params["bih_o"], params["bhh_o"])
    brz_c = fused_rz_bias(params["bih_c"], params["bhh_c"])
    bin_o = params["bih_o"][2].astype(f32); bhn_o = params["bhh_o"][2].astype(f32)
    bin_c = params["bih_c"][2].astype(f32); bhn_c = params["bhh_c"][2].astype(f32)

    w_enc = params["w_enc"].astype(bf16)
    b_enc = params["b_enc"].astype(f32)

    # --- lane-dense decode: pad n_actions up to a multiple of 128 ------------
    n_act_pad = ((n_actions + 127) // 128) * 128
    w_dec = jnp.zeros((H, n_act_pad), bf16).at[:, :n_actions].set(
        params["w_dec"].astype(bf16))
    b_dec = jnp.zeros((1, n_act_pad), f32).at[:, :n_actions].set(
        params["b_dec"].astype(f32))

    def rows_spec(feat):
        return pl.BlockSpec((rows_blk, feat), lambda i: (i, 0))

    def full_spec(shape):
        return pl.BlockSpec(shape, lambda i: (0,) * len(shape))

    kernel = functools.partial(_commnet_kernel, k_rounds=k_rounds,
                               n_agents=n_agents)

    weights_pad, h_out = pl.pallas_call(
        kernel,
        out_shape=(jax.ShapeDtypeStruct((N, n_act_pad), f32),
                   jax.ShapeDtypeStruct((N, H), f32)),
        grid=grid,
        in_specs=[rows_spec(in_dim), rows_spec(H),
                  full_spec(w_enc.shape), full_spec(b_enc.shape),
                  full_spec(wih_o.shape), full_spec(whh_o.shape),
                  full_spec(brz_o.shape), full_spec(bin_o.shape),
                  full_spec(bhn_o.shape),
                  full_spec(wih_c.shape), full_spec(whh_c.shape),
                  full_spec(brz_c.shape), full_spec(bin_c.shape),
                  full_spec(bhn_c.shape),
                  full_spec(w_dec.shape), full_spec(b_dec.shape)],
        out_specs=(pl.BlockSpec((rows_blk, n_act_pad), lambda i: (i, 0)),
                   pl.BlockSpec((rows_blk, H), lambda i: (i, 0))),
        compiler_params=pltpu.CompilerParams(
            dimension_semantics=("parallel",)),
    )(obs, h_in, w_enc, b_enc,
      wih_o, whh_o, brz_o, bin_o, bhn_o,
      wih_c, whh_c, brz_c, bin_c, bhn_c,
      w_dec, b_dec)

    return weights_pad[:, :n_actions], h_out


# --------------------------- pure-JAX reference -------------------------------

def commnet_reference(obs, hidden_state, params, *, n_agents: int, k_rounds: int):
    H = params["w_enc"].shape[1]
    h_in = hidden_state.reshape(-1, H)

    def gru(x, h, wih, whh, bih, bhh):
        r = jax.nn.sigmoid(x @ wih[0] + bih[0] + h @ whh[0] + bhh[0])
        z = jax.nn.sigmoid(x @ wih[1] + bih[1] + h @ whh[1] + bhh[1])
        n = jnp.tanh(x @ wih[2] + bih[2] + r * (h @ whh[2] + bhh[2]))
        return (1.0 - z) * n + z * h

    enc = jax.nn.sigmoid(obs @ params["w_enc"] + params["b_enc"])
    h_out = gru(enc, h_in, params["wih_o"], params["whh_o"],
                params["bih_o"], params["bhh_o"])
    h = h_out
    for k in range(k_rounds):
        if k == 0:
            c = jnp.zeros_like(h)
        else:
            hh = h.reshape(-1, n_agents, H)
            tot = hh.sum(axis=1, keepdims=True)          # (B, 1, H)
            c = (tot - hh) / float(n_agents)             # exclude self, /n_agents
            c = c.reshape(-1, H)
        h = gru(c, h, params["wih_c"], params["whh_c"],
                params["bih_c"], params["bhh_c"])
    weights = h @ params["w_dec"] + params["b_dec"]
    return weights, h_out


# ------------------------------- main -----------------------------------------

if __name__ == "__main__":
    # args
    batch = 2
    n_agents = 4
    input_shape = 16
    rnn_hidden_dim = 32
    n_actions = 6
    k_rounds = 2
    N = batch * n_agents

    key = jax.random.PRNGKey(0)
    ks = jax.random.split(key, 20)
    s = 0.1

    def rnd(i, shape):
        return (s * jax.random.normal(ks[i], shape)).astype(jnp.float32)

    params = {
        # encoding: Linear(input_shape, H)  stored (in, out)
        "w_enc": rnd(0, (input_shape, rnn_hidden_dim)),
        "b_enc": rnd(1, (1, rnn_hidden_dim)),
        # f_obs GRUCell(H, H): gate-stacked (3, H, H) / (3, 1, H), order (r, z, n)
        "wih_o": rnd(2, (3, rnn_hidden_dim, rnn_hidden_dim)),
        "whh_o": rnd(3, (3, rnn_hidden_dim, rnn_hidden_dim)),
        "bih_o": rnd(4, (3, 1, rnn_hidden_dim)),
        "bhh_o": rnd(5, (3, 1, rnn_hidden_dim)),
        # f_comm GRUCell(H, H)
        "wih_c": rnd(6, (3, rnn_hidden_dim, rnn_hidden_dim)),
        "whh_c": rnd(7, (3, rnn_hidden_dim, rnn_hidden_dim)),
        "bih_c": rnd(8, (3, 1, rnn_hidden_dim)),
        "bhh_c": rnd(9, (3, 1, rnn_hidden_dim)),
        # decoding: Linear(H, n_actions)
        "w_dec": rnd(10, (rnn_hidden_dim, n_actions)),
        "b_dec": rnd(11, (1, n_actions)),
    }

    obs = jax.random.normal(ks[12], (N, input_shape), dtype=jnp.float32)
    hidden_state = jax.random.normal(ks[13], (batch, n_agents, rnn_hidden_dim),
                                     dtype=jnp.float32)

    weights, h_out = commnet_forward(obs, hidden_state, params,
                                     n_agents=n_agents, k_rounds=k_rounds)
    jax.block_until_ready((weights, h_out))

    ref_w, ref_h = commnet_reference(obs, hidden_state, params,
                                     n_agents=n_agents, k_rounds=k_rounds)
    assert weights.shape == (N, n_actions) and h_out.shape == (N, rnn_hidden_dim)
    # bf16 MXU operands with f32 accumulation -> loosened tolerance vs f32 ref.
    assert jnp.allclose(weights, ref_w, atol=2e-2, rtol=2e-2)
    assert jnp.allclose(h_out, ref_h, atol=2e-2, rtol=2e-2)

    print("KERNEL_OK")
</pallas_src>

<mosaic_0001>
module attributes {stable_mosaic.version = 11 : i64} {
  func.func @_commnet_kernel(%arg0: i32, %arg1: memref<8x16xf32, #tpu.memory_space<vmem>>, %arg2: memref<8x32xf32, #tpu.memory_space<vmem>>, %arg3: memref<16x32xbf16, #tpu.memory_space<vmem>>, %arg4: memref<1x32xf32, #tpu.memory_space<vmem>>, %arg5: memref<32x96xbf16, #tpu.memory_space<vmem>>, %arg6: memref<32x96xbf16, #tpu.memory_space<vmem>>, %arg7: memref<1x64xf32, #tpu.memory_space<vmem>>, %arg8: memref<1x32xf32, #tpu.memory_space<vmem>>, %arg9: memref<1x32xf32, #tpu.memory_space<vmem>>, %arg10: memref<32x96xbf16, #tpu.memory_space<vmem>>, %arg11: memref<32x96xbf16, #tpu.memory_space<vmem>>, %arg12: memref<1x64xf32, #tpu.memory_space<vmem>>, %arg13: memref<1x32xf32, #tpu.memory_space<vmem>>, %arg14: memref<1x32xf32, #tpu.memory_space<vmem>>, %arg15: memref<32x128xbf16, #tpu.memory_space<vmem>>, %arg16: memref<1x128xf32, #tpu.memory_space<vmem>>, %arg17: memref<8x128xf32, #tpu.memory_space<vmem>>, %arg18: memref<8x32xf32, #tpu.memory_space<vmem>>) attributes {dimension_semantics = [#tpu.dimension_semantics<parallel>], iteration_bounds = array<i64: 1>, scalar_prefetch = 0 : i64, scratch_operands = 0 : i64, tpu.core_type = #tpu.core_type<tc>, window_params = [{transform_indices = @transform_0, window_bounds = array<i64: 8, 16>}, {transform_indices = @transform_1, window_bounds = array<i64: 8, 32>}, {pipeline_mode = #tpu.pipeline_mode<synchronous>, transform_indices = @transform_2, window_bounds = array<i64: 16, 32>}, {pipeline_mode = #tpu.pipeline_mode<synchronous>, transform_indices = @transform_3, window_bounds = array<i64: 1, 32>}, {pipeline_mode = #tpu.pipeline_mode<synchronous>, transform_indices = @transform_4, window_bounds = array<i64: 32, 96>}, {pipeline_mode = #tpu.pipeline_mode<synchronous>, transform_indices = @transform_5, window_bounds = array<i64: 32, 96>}, {pipeline_mode = #tpu.pipeline_mode<synchronous>, transform_indices = @transform_6, window_bounds = array<i64: 1, 64>}, {pipeline_mode = #tpu.pipeline_mode<synchronous>, transform_indices = @transform_7, window_bounds = array<i64: 1, 32>}, {pipeline_mode = #tpu.pipeline_mode<synchronous>, transform_indices = @transform_8, window_bounds = array<i64: 1, 32>}, {pipeline_mode = #tpu.pipeline_mode<synchronous>, transform_indices = @transform_9, window_bounds = array<i64: 32, 96>}, {pipeline_mode = #tpu.pipeline_mode<synchronous>, transform_indices = @transform_10, window_bounds = array<i64: 32, 96>}, {pipeline_mode = #tpu.pipeline_mode<synchronous>, transform_indices = @transform_11, window_bounds = array<i64: 1, 64>}, {pipeline_mode = #tpu.pipeline_mode<synchronous>, transform_indices = @transform_12, window_bounds = array<i64: 1, 32>}, {pipeline_mode = #tpu.pipeline_mode<synchronous>, transform_indices = @transform_13, window_bounds = array<i64: 1, 32>}, {pipeline_mode = #tpu.pipeline_mode<synchronous>, transform_indices = @transform_14, window_bounds = array<i64: 32, 128>}, {pipeline_mode = #tpu.pipeline_mode<synchronous>, transform_indices = @transform_15, window_bounds = array<i64: 1, 128>}, {transform_indices = @transform_16, window_bounds = array<i64: 8, 128>}, {transform_indices = @transform_17, window_bounds = array<i64: 8, 32>}]} {
    %c0 = arith.constant 0 : index
    %c0_0 = arith.constant 0 : index
    %0 = vector.load %arg1[%c0, %c0_0] : memref<8x16xf32, #tpu.memory_space<vmem>>, vector<8x16xf32>
    %1 = arith.truncf %0 : vector<8x16xf32> to vector<8x16xbf16>
    %c0_1 = arith.constant 0 : index
    %c0_2 = arith.constant 0 : index
    %2 = vector.load %arg3[%c0_1, %c0_2] : memref<16x32xbf16, #tpu.memory_space<vmem>>, vector<16x32xbf16>
    %cst = arith.constant dense<0.000000e+00> : vector<8x32xf32>
    %3 = tpu.matmul %1, %2, %cst {dimension_numbers = #tpu.dot_dimension_numbers<[1], [0], [0], [1], [0, 0, 1, 1], [], []>} : vector<8x16xbf16>, vector<16x32xbf16>, vector<8x32xf32> -> vector<8x32xf32>
    %c0_3 = arith.constant 0 : index
    %c0_4 = arith.constant 0 : index
    %4 = vector.load %arg4[%c0_3, %c0_4] : memref<1x32xf32, #tpu.memory_space<vmem>>, vector<1x32xf32>
    %5 = vector.broadcast %4 : vector<1x32xf32> to vector<8x32xf32>
    %6 = arith.addf %3, %5 : vector<8x32xf32>
    %7 = arith.negf %6 : vector<8x32xf32>
    %8 = math.exp %7 : vector<8x32xf32>
    %cst_5 = arith.constant 1.000000e+00 : f32
    %9 = vector.broadcast %cst_5 : f32 to vector<8x32xf32>
    %10 = arith.addf %9, %8 : vector<8x32xf32>
    %11 = arith.divf %9, %10 : vector<8x32xf32>
    %c0_6 = arith.constant 0 : index
    %c0_7 = arith.constant 0 : index
    %12 = vector.load %arg2[%c0_6, %c0_7] : memref<8x32xf32, #tpu.memory_space<vmem>>, vector<8x32xf32>
    %13 = arith.truncf %12 : vector<8x32xf32> to vector<8x32xbf16>
    %c0_8 = arith.constant 0 : index
    %c0_9 = arith.constant 0 : index
    %14 = vector.load %arg6[%c0_8, %c0_9] : memref<32x96xbf16, #tpu.memory_space<vmem>>, vector<32x96xbf16>
    %cst_10 = arith.constant dense<0.000000e+00> : vector<8x96xf32>
    %15 = tpu.matmul %13, %14, %cst_10 {dimension_numbers = #tpu.dot_dimension_numbers<[1], [0], [0], [1], [0, 0, 1, 1], [], []>} : vector<8x32xbf16>, vector<32x96xbf16>, vector<8x96xf32> -> vector<8x96xf32>
    %16 = arith.truncf %11 : vector<8x32xf32> to vector<8x32xbf16>
    %c0_11 = arith.constant 0 : index
    %c0_12 = arith.constant 0 : index
    %17 = vector.load %arg5[%c0_11, %c0_12] : memref<32x96xbf16, #tpu.memory_space<vmem>>, vector<32x96xbf16>
    %cst_13 = arith.constant dense<0.000000e+00> : vector<8x96xf32>
    %18 = tpu.matmul %16, %17, %cst_13 {dimension_numbers = #tpu.dot_dimension_numbers<[1], [0], [0], [1], [0, 0, 1, 1], [], []>} : vector<8x32xbf16>, vector<32x96xbf16>, vector<8x96xf32> -> vector<8x96xf32>
    %19 = vector.extract_strided_slice %18 {offsets = [0, 0], sizes = [8, 64], strides = [1, 1]} : vector<8x96xf32> to vector<8x64xf32>
    %20 = vector.extract_strided_slice %15 {offsets = [0, 0], sizes = [8, 64], strides = [1, 1]} : vector<8x96xf32> to vector<8x64xf32>
    %21 = arith.addf %19, %20 : vector<8x64xf32>
    %c0_14 = arith.constant 0 : index
    %c0_15 = arith.constant 0 : index
    %22 = vector.load %arg7[%c0_14, %c0_15] : memref<1x64xf32, #tpu.memory_space<vmem>>, vector<1x64xf32>
    %23 = vector.broadcast %22 : vector<1x64xf32> to vector<8x64xf32>
    %24 = arith.addf %21, %23 : vector<8x64xf32>
    %25 = vector.extract_strided_slice %18 {offsets = [0, 64], sizes = [8, 32], strides = [1, 1]} : vector<8x96xf32> to vector<8x32xf32>
    %c0_16 = arith.constant 0 : index
    %c0_17 = arith.constant 0 : index
    %26 = vector.load %arg8[%c0_16, %c0_17] : memref<1x32xf32, #tpu.memory_space<vmem>>, vector<1x32xf32>
    %27 = vector.broadcast %26 : vector<1x32xf32> to vector<8x32xf32>
    %28 = arith.addf %25, %27 : vector<8x32xf32>
    %29 = arith.negf %24 : vector<8x64xf32>
    %30 = math.exp %29 : vector<8x64xf32>
    %cst_18 = arith.constant 1.000000e+00 : f32
    %31 = vector.broadcast %cst_18 : f32 to vector<8x64xf32>
    %32 = arith.addf %31, %30 : vector<8x64xf32>
    %33 = arith.divf %31, %32 : vector<8x64xf32>
    %34 = vector.extract_strided_slice %33 {offsets = [0, 0], sizes = [8, 32], strides = [1, 1]} : vector<8x64xf32> to vector<8x32xf32>
    %35 = vector.extract_strided_slice %33 {offsets = [0, 32], sizes = [8, 32], strides = [1, 1]} : vector<8x64xf32> to vector<8x32xf32>
    %36 = vector.extract_strided_slice %15 {offsets = [0, 64], sizes = [8, 32], strides = [1, 1]} : vector<8x96xf32> to vector<8x32xf32>
    %c0_19 = arith.constant 0 : index
    %c0_20 = arith.constant 0 : index
    %37 = vector.load %arg9[%c0_19, %c0_20] : memref<1x32xf32, #tpu.memory_space<vmem>>, vector<1x32xf32>
    %38 = vector.broadcast %37 : vector<1x32xf32> to vector<8x32xf32>
    %39 = arith.addf %36, %38 : vector<8x32xf32>
    %40 = arith.mulf %34, %39 : vector<8x32xf32>
    %41 = arith.addf %28, %40 : vector<8x32xf32>
    %42 = math.tanh %41 : vector<8x32xf32>
    %cst_21 = arith.constant 1.000000e+00 : f32
    %43 = vector.broadcast %cst_21 : f32 to vector<8x32xf32>
    %44 = arith.subf %43, %35 : vector<8x32xf32>
    %45 = arith.mulf %44, %42 : vector<8x32xf32>
    %46 = arith.mulf %35, %12 : vector<8x32xf32>
    %47 = arith.addf %45, %46 : vector<8x32xf32>
    %c0_22 = arith.constant 0 : index
    %c0_23 = arith.constant 0 : index
    %48 = vector.load %arg18[%c0_22, %c0_23] : memref<8x32xf32, #tpu.memory_space<vmem>>, vector<8x32xf32>
    tpu.vector_store %arg18[%c0_22, %c0_23], %47 {strides = array<i32>} : memref<8x32xf32, #tpu.memory_space<vmem>>, vector<8x32xf32>,
    %49 = arith.truncf %47 : vector<8x32xf32> to vector<8x32xbf16>
    %c0_24 = arith.constant 0 : index
    %c0_25 = arith.constant 0 : index
    %50 = vector.load %arg11[%c0_24, %c0_25] : memref<32x96xbf16, #tpu.memory_space<vmem>>, vector<32x96xbf16>
    %cst_26 = arith.constant dense<0.000000e+00> : vector<8x96xf32>
    %51 = tpu.matmul %49, %50, %cst_26 {dimension_numbers = #tpu.dot_dimension_numbers<[1], [0], [0], [1], [0, 0, 1, 1], [], []>} : vector<8x32xbf16>, vector<32x96xbf16>, vector<8x96xf32> -> vector<8x96xf32>
    %52 = vector.extract_strided_slice %51 {offsets = [0, 0], sizes = [8, 64], strides = [1, 1]} : vector<8x96xf32> to vector<8x64xf32>
    %c0_27 = arith.constant 0 : index
    %c0_28 = arith.constant 0 : index
    %53 = vector.load %arg12[%c0_27, %c0_28] : memref<1x64xf32, #tpu.memory_space<vmem>>, vector<1x64xf32>
    %54 = vector.broadcast %53 : vector<1x64xf32> to vector<8x64xf32>
    %55 = arith.addf %52, %54 : vector<8x64xf32>
    %c0_29 = arith.constant 0 : index
    %c0_30 = arith.constant 0 : index
    %56 = vector.load %arg13[%c0_29, %c0_30] : memref<1x32xf32, #tpu.memory_space<vmem>>, vector<1x32xf32>
    %57 = arith.negf %55 : vector<8x64xf32>
    %58 = math.exp %57 : vector<8x64xf32>
    %cst_31 = arith.constant 1.000000e+00 : f32
    %59 = vector.broadcast %cst_31 : f32 to vector<8x64xf32>
    %60 = arith.addf %59, %58 : vector<8x64xf32>
    %61 = arith.divf %59, %60 : vector<8x64xf32>
    %62 = vector.extract_strided_slice %61 {offsets = [0, 0], sizes = [8, 32], strides = [1, 1]} : vector<8x64xf32> to vector<8x32xf32>
    %63 = vector.extract_strided_slice %61 {offsets = [0, 32], sizes = [8, 32], strides = [1, 1]} : vector<8x64xf32> to vector<8x32xf32>
    %64 = vector.extract_strided_slice %51 {offsets = [0, 64], sizes = [8, 32], strides = [1, 1]} : vector<8x96xf32> to vector<8x32xf32>
    %c0_32 = arith.constant 0 : index
    %c0_33 = arith.constant 0 : index
    %65 = vector.load %arg14[%c0_32, %c0_33] : memref<1x32xf32, #tpu.memory_space<vmem>>, vector<1x32xf32>
    %66 = vector.broadcast %65 : vector<1x32xf32> to vector<8x32xf32>
    %67 = arith.addf %64, %66 : vector<8x32xf32>
    %68 = arith.mulf %62, %67 : vector<8x32xf32>
    %69 = vector.broadcast %56 : vector<1x32xf32> to vector<8x32xf32>
    %70 = arith.addf %69, %68 : vector<8x32xf32>
    %71 = math.tanh %70 : vector<8x32xf32>
    %cst_34 = arith.constant 1.000000e+00 : f32
    %72 = vector.broadcast %cst_34 : f32 to vector<8x32xf32>
    %73 = arith.subf %72, %63 : vector<8x32xf32>
    %74 = arith.mulf %73, %71 : vector<8x32xf32>
    %75 = arith.mulf %63, %47 : vector<8x32xf32>
    %76 = arith.addf %74, %75 : vector<8x32xf32>
    %77 = vector.shape_cast %76 : vector<8x32xf32> to vector<2x4x32xf32>
    %cst_35 = arith.constant dense<0.000000e+00> : vector<2x32xf32>
    %78 = vector.multi_reduction <add>, %77, %cst_35 [1] : vector<2x4x32xf32> to vector<2x32xf32>
    %79 = vector.shape_cast %78 : vector<2x32xf32> to vector<2x1x32xf32>
    %80 = vector.broadcast %79 : vector<2x1x32xf32> to vector<2x4x32xf32>
    %81 = arith.subf %80, %77 : vector<2x4x32xf32>
    %cst_36 = arith.constant 2.500000e-01 : f32
    %82 = vector.broadcast %cst_36 : f32 to vector<2x4x32xf32>
    %83 = arith.mulf %81, %82 : vector<2x4x32xf32>
    %84 = vector.shape_cast %83 : vector<2x4x32xf32> to vector<8x32xf32>
    %85 = arith.truncf %76 : vector<8x32xf32> to vector<8x32xbf16>
    %c0_37 = arith.constant 0 : index
    %c0_38 = arith.constant 0 : index
    %86 = vector.load %arg11[%c0_37, %c0_38] : memref<32x96xbf16, #tpu.memory_space<vmem>>, vector<32x96xbf16>
    %cst_39 = arith.constant dense<0.000000e+00> : vector<8x96xf32>
    %87 = tpu.matmul %85, %86, %cst_39 {dimension_numbers = #tpu.dot_dimension_numbers<[1], [0], [0], [1], [0, 0, 1, 1], [], []>} : vector<8x32xbf16>, vector<32x96xbf16>, vector<8x96xf32> -> vector<8x96xf32>
    %88 = arith.truncf %84 : vector<8x32xf32> to vector<8x32xbf16>
    %c0_40 = arith.constant 0 : index
    %c0_41 = arith.constant 0 : index
    %89 = vector.load %arg10[%c0_40, %c0_41] : memref<32x96xbf16, #tpu.memory_space<vmem>>, vector<32x96xbf16>
    %cst_42 = arith.constant dense<0.000000e+00> : vector<8x96xf32>
    %90 = tpu.matmul %88, %89, %cst_42 {dimension_numbers = #tpu.dot_dimension_numbers<[1], [0], [0], [1], [0, 0, 1, 1], [], []>} : vector<8x32xbf16>, vector<32x96xbf16>, vector<8x96xf32> -> vector<8x96xf32>
    %91 = vector.extract_strided_slice %90 {offsets = [0, 0], sizes = [8, 64], strides = [1, 1]} : vector<8x96xf32> to vector<8x64xf32>
    %92 = vector.extract_strided_slice %87 {offsets = [0, 0], sizes = [8, 64], strides = [1, 1]} : vector<8x96xf32> to vector<8x64xf32>
    %93 = arith.addf %91, %92 : vector<8x64xf32>
    %c0_43 = arith.constant 0 : index
    %c0_44 = arith.constant 0 : index
    %94 = vector.load %arg12[%c0_43, %c0_44] : memref<1x64xf32, #tpu.memory_space<vmem>>, vector<1x64xf32>
    %95 = vector.broadcast %94 : vector<1x64xf32> to vector<8x64xf32>
    %96 = arith.addf %93, %95 : vector<8x64xf32>
    %97 = vector.extract_strided_slice %90 {offsets = [0, 64], sizes = [8, 32], strides = [1, 1]} : vector<8x96xf32> to vector<8x32xf32>
    %c0_45 = arith.constant 0 : index
    %c0_46 = arith.constant 0 : index
    %98 = vector.load %arg13[%c0_45, %c0_46] : memref<1x32xf32, #tpu.memory_space<vmem>>, vector<1x32xf32>
    %99 = vector.broadcast %98 : vector<1x32xf32> to vector<8x32xf32>
    %100 = arith.addf %97, %99 : vector<8x32xf32>
    %101 = arith.negf %96 : vector<8x64xf32>
    %102 = math.exp %101 : vector<8x64xf32>
    %cst_47 = arith.constant 1.000000e+00 : f32
    %103 = vector.broadcast %cst_47 : f32 to vector<8x64xf32>
    %104 = arith.addf %103, %102 : vector<8x64xf32>
    %105 = arith.divf %103, %104 : vector<8x64xf32>
    %106 = vector.extract_strided_slice %105 {offsets = [0, 0], sizes = [8, 32], strides = [1, 1]} : vector<8x64xf32> to vector<8x32xf32>
    %107 = vector.extract_strided_slice %105 {offsets = [0, 32], sizes = [8, 32], strides = [1, 1]} : vector<8x64xf32> to vector<8x32xf32>
    %108 = vector.extract_strided_slice %87 {offsets = [0, 64], sizes = [8, 32], strides = [1, 1]} : vector<8x96xf32> to vector<8x32xf32>
    %c0_48 = arith.constant 0 : index
    %c0_49 = arith.constant 0 : index
    %109 = vector.load %arg14[%c0_48, %c0_49] : memref<1x32xf32, #tpu.memory_space<vmem>>, vector<1x32xf32>
    %110 = vector.broadcast %109 : vector<1x32xf32> to vector<8x32xf32>
    %111 = arith.addf %108, %110 : vector<8x32xf32>
    %112 = arith.mulf %106, %111 : vector<8x32xf32>
    %113 = arith.addf %100, %112 : vector<8x32xf32>
    %114 = math.tanh %113 : vector<8x32xf32>
    %cst_50 = arith.constant 1.000000e+00 : f32
    %115 = vector.broadcast %cst_50 : f32 to vector<8x32xf32>
    %116 = arith.subf %115, %107 : vector<8x32xf32>
    %117 = arith.mulf %116, %114 : vector<8x32xf32>
    %118 = arith.mulf %107, %76 : vector<8x32xf32>
    %119 = arith.addf %117, %118 : vector<8x32xf32>
    %120 = arith.truncf %119 : vector<8x32xf32> to vector<8x32xbf16>
    %c0_51 = arith.constant 0 : index
    %c0_52 = arith.constant 0 : index
    %121 = vector.load %arg15[%c0_51, %c0_52] : memref<32x128xbf16, #tpu.memory_space<vmem>>, vector<32x128xbf16>
    %cst_53 = arith.constant dense<0.000000e+00> : vector<8x128xf32>
    %122 = tpu.matmul %120, %121, %cst_53 {dimension_numbers = #tpu.dot_dimension_numbers<[1], [0], [0], [1], [0, 0, 1, 1], [], []>} : vector<8x32xbf16>, vector<32x128xbf16>, vector<8x128xf32> -> vector<8x128xf32>
    %c0_54 = arith.constant 0 : index
    %c0_55 = arith.constant 0 : index
    %123 = vector.load %arg16[%c0_54, %c0_55] : memref<1x128xf32, #tpu.memory_space<vmem>>, vector<1x128xf32>
    %124 = vector.broadcast %123 : vector<1x128xf32> to vector<8x128xf32>
    %125 = arith.addf %122, %124 : vector<8x128xf32>
    %c0_56 = arith.constant 0 : index
    %c0_57 = arith.constant 0 : index
    %126 = vector.load %arg17[%c0_56, %c0_57] : memref<8x128xf32, #tpu.memory_space<vmem>>, vector<8x128xf32>
    tpu.vector_store %arg17[%c0_56, %c0_57], %125 {strides = array<i32>} : memref<8x128xf32, #tpu.memory_space<vmem>>, vector<8x128xf32>,
    return
  }
  func.func @transform_0(%arg0: i32) -> (i32, i32) {
    %c0_i32 = arith.constant 0 : i32
    %c0_i32_0 = arith.constant 0 : i32
    return %arg0, %c0_i32 : i32, i32
  }
  func.func @transform_1(%arg0: i32) -> (i32, i32) {
    %c0_i32 = arith.constant 0 : i32
    %c0_i32_0 = arith.constant 0 : i32
    return %arg0, %c0_i32 : i32, i32
  }
  func.func @transform_2(%arg0: i32) -> (i32, i32) {
    %c0_i32 = arith.constant 0 : i32
    %c0_i32_0 = arith.constant 0 : i32
    %c0_i32_1 = arith.constant 0 : i32
    return %c0_i32, %c0_i32_0 : i32, i32
  }
  func.func @transform_3(%arg0: i32) -> (i32, i32) {
    %c0_i32 = arith.constant 0 : i32
    %c0_i32_0 = arith.constant 0 : i32
    %c0_i32_1 = arith.constant 0 : i32
    return %c0_i32, %c0_i32_0 : i32, i32
  }
  func.func @transform_4(%arg0: i32) -> (i32, i32) {
    %c0_i32 = arith.constant 0 : i32
    %c0_i32_0 = arith.constant 0 : i32
    %c0_i32_1 = arith.constant 0 : i32
    return %c0_i32, %c0_i32_0 : i32, i32
  }
  func.func @transform_5(%arg0: i32) -> (i32, i32) {
    %c0_i32 = arith.constant 0 : i32
    %c0_i32_0 = arith.constant 0 : i32
    %c0_i32_1 = arith.constant 0 : i32
    return %c0_i32, %c0_i32_0 : i32, i32
  }
  func.func @transform_6(%arg0: i32) -> (i32, i32) {
    %c0_i32 = arith.constant 0 : i32
    %c0_i32_0 = arith.constant 0 : i32
    %c0_i32_1 = arith.constant 0 : i32
    return %c0_i32, %c0_i32_0 : i32, i32
  }
  func.func @transform_7(%arg0: i32) -> (i32, i32) {
    %c0_i32 = arith.constant 0 : i32
    %c0_i32_0 = arith.constant 0 : i32
    %c0_i32_1 = arith.constant 0 : i32
    return %c0_i32, %c0_i32_0 : i32, i32
  }
  func.func @transform_8(%arg0: i32) -> (i32, i32) {
    %c0_i32 = arith.constant 0 : i32
    %c0_i32_0 = arith.constant 0 : i32
    %c0_i32_1 = arith.constant 0 : i32
    return %c0_i32, %c0_i32_0 : i32, i32
  }
  func.func @transform_9(%arg0: i32) -> (i32, i32) {
    %c0_i32 = arith.constant 0 : i32
    %c0_i32_0 = arith.constant 0 : i32
    %c0_i32_1 = arith.constant 0 : i32
    return %c0_i32, %c0_i32_0 : i32, i32
  }
  func.func @transform_10(%arg0: i32) -> (i32, i32) {
    %c0_i32 = arith.constant 0 : i32
    %c0_i32_0 = arith.constant 0 : i32
    %c0_i32_1 = arith.constant 0 : i32
    return %c0_i32, %c0_i32_0 : i32, i32
  }
  func.func @transform_11(%arg0: i32) -> (i32, i32) {
    %c0_i32 = arith.constant 0 : i32
    %c0_i32_0 = arith.constant 0 : i32
    %c0_i32_1 = arith.constant 0 : i32
    return %c0_i32, %c0_i32_0 : i32, i32
  }
  func.func @transform_12(%arg0: i32) -> (i32, i32) {
    %c0_i32 = arith.constant 0 : i32
    %c0_i32_0 = arith.constant 0 : i32
    %c0_i32_1 = arith.constant 0 : i32
    return %c0_i32, %c0_i32_0 : i32, i32
  }
  func.func @transform_13(%arg0: i32) -> (i32, i32) {
    %c0_i32 = arith.constant 0 : i32
    %c0_i32_0 = arith.constant 0 : i32
    %c0_i32_1 = arith.constant 0 : i32
    return %c0_i32, %c0_i32_0 : i32, i32
  }
  func.func @transform_14(%arg0: i32) -> (i32, i32) {
    %c0_i32 = arith.constant 0 : i32
    %c0_i32_0 = arith.constant 0 : i32
    %c0_i32_1 = arith.constant 0 : i32
    return %c0_i32, %c0_i32_0 : i32, i32
  }
  func.func @transform_15(%arg0: i32) -> (i32, i32) {
    %c0_i32 = arith.constant 0 : i32
    %c0_i32_0 = arith.constant 0 : i32
    %c0_i32_1 = arith.constant 0 : i32
    return %c0_i32, %c0_i32_0 : i32, i32
  }
  func.func @transform_16(%arg0: i32) -> (i32, i32) {
    %c0_i32 = arith.constant 0 : i32
    %c0_i32_0 = arith.constant 0 : i32
    return %arg0, %c0_i32 : i32, i32
  }
  func.func @transform_17(%arg0: i32) -> (i32, i32) {
    %c0_i32 = arith.constant 0 : i32
    %c0_i32_0 = arith.constant 0 : i32
    return %arg0, %c0_i32 : i32, i32
  }
}

</mosaic_0001>

<llo_original>
// kernel: tpu_custom_call.1
$region0: #{tpu_custom_call.1}
  #allocation0 [shape = 'u32[]', space=smem, size = 0x4, offset = 0x4, fixed_abs, tag = 'smem constant byte address 0x4 - core index']
  #allocation1 [shape = 'u32[144,128]{1,0:T(1,128)}', space=vmem, size = 0x12000, scoped, tag = 'internal scratch']
  %s0 = inlined_call_operand.hbm [shape: f32[8,16], index: 0, kind: input, shape index: {}]
  %s1 = inlined_call_operand.hbm [shape: f32[8,32], index: 1, kind: input, shape index: {}]
  %s2 = inlined_call_operand.hbm [shape: bf16[16,32], index: 2, kind: input, shape index: {}]
  %s3 = inlined_call_operand.vmem [shape: f32[1,32], index: 3, kind: input, shape index: {}]
  %s4 = inlined_call_operand.hbm [shape: bf16[32,96], index: 4, kind: input, shape index: {}]
  %s5 = inlined_call_operand.vmem [shape: bf16[32,96], index: 5, kind: input, shape index: {}]
  %s6 = inlined_call_operand.hbm [shape: f32[1,64], index: 6, kind: input, shape index: {}]
  %s7 = inlined_call_operand.hbm [shape: f32[1,32], index: 7, kind: input, shape index: {}]
  %s8 = inlined_call_operand.hbm [shape: f32[1,32], index: 8, kind: input, shape index: {}]
  %s9 = inlined_call_operand.vmem [shape: bf16[32,96], index: 9, kind: input, shape index: {}]
  %s10 = inlined_call_operand.hbm [shape: bf16[32,96], index: 10, kind: input, shape index: {}]
  %s11 = inlined_call_operand.hbm [shape: f32[1,64], index: 11, kind: input, shape index: {}]
  %s12 = inlined_call_operand.hbm [shape: f32[1,32], index: 12, kind: input, shape index: {}]
  %s13 = inlined_call_operand.hbm [shape: f32[1,32], index: 13, kind: input, shape index: {}]
  %s14 = inlined_call_operand.vmem [shape: bf16[32,128], index: 14, kind: input, shape index: {}]
  %s15 = inlined_call_operand.vmem [shape: f32[1,128], index: 15, kind: input, shape index: {}]
  %s16 = inlined_call_operand.hbm [shape: f32[8,128], index: 16, kind: output, shape index: {0}]
  %s17 = inlined_call_operand.hbm [shape: f32[8,32], index: 17, kind: output, shape index: {1}]
  %18 = xla_tuple %s16, %s17
  %s19 = sld [smem:[#allocation0]]
  $region126: #{tpu_custom_call.1} parent=0
    _
  %s21 = ssub.s32 1, %s19
  %s22 = scalar_select 0, %s21, %s19
  $region1: #{tpu_custom_call.1} parent=0
    #allocation2 [shape = 'u8[4096]{0}', space=vmem, size = 0x1000, scoped, tag = 'input window, operand 0, single buffered']
    #allocation3 [shape = 's32[1]{0}', space=sflag, size = 0x4, scoped, tag = 'scoped memory for tpu_custom_call.1']
    #allocation4 [shape = 's32[1]{0}', space=sflag, size = 0x4, scoped, tag = 'scoped memory for tpu_custom_call.1']
    #allocation5 [shape = 'u8[4096]{0}', space=vmem, size = 0x1000, scoped, tag = 'input window, operand 1, single buffered']
    #allocation6 [shape = 's32[1]{0}', space=sflag, size = 0x4, scoped, tag = 'scoped memory for tpu_custom_call.1']
    #allocation7 [shape = 'u8[4096]{0}', space=vmem, size = 0x1000, scoped, tag = 'input window, operand 2, single buffered']
    #allocation8 [shape = 'u8[8192]{0}', space=vmem, size = 0x2000, scoped, tag = 'input window, operand 4, single buffered']
    #allocation9 [shape = 's32[1]{0}', space=sflag, size = 0x4, scoped, tag = 'scoped memory for tpu_custom_call.1']
    #allocation10 [shape = 'u8[512]{0}', space=vmem, size = 0x400, scoped, tag = 'input window, operand 6, single buffered']
    #allocation11 [shape = 'u8[512]{0}', space=vmem, size = 0x400, scoped, tag = 'input window, operand 7, single buffered']
    #allocation12 [shape = 's32[1]{0}', space=sflag, size = 0x4, scoped, tag = 'scoped memory for tpu_custom_call.1']
    #allocation13 [shape = 'u8[512]{0}', space=vmem, size = 0x400, scoped, tag = 'input window, operand 8, single buffered']
    #allocation14 [shape = 'u8[8192]{0}', space=vmem, size = 0x2000, scoped, tag = 'input window, operand 10, single buffered']
    #allocation15 [shape = 's32[1]{0}', space=sflag, size = 0x4, scoped, tag = 'scoped memory for tpu_custom_call.1']
    #allocation16 [shape = 'u8[512]{0}', space=vmem, size = 0x400, scoped, tag = 'input window, operand 11, single buffered']
    #allocation17 [shape = 'u8[512]{0}', space=vmem, size = 0x400, scoped, tag = 'input window, operand 12, single buffered']
    #allocation18 [shape = 's32[1]{0}', space=sflag, size = 0x4, scoped, tag = 'scoped memory for tpu_custom_call.1']
    #allocation19 [shape = 'u8[512]{0}', space=vmem, size = 0x400, scoped, tag = 'input window, operand 13, single buffered']
    #allocation20 [shape = 'u8[4096]{0}', space=vmem, size = 0x1000, scoped, tag = 'output window, operand 0, single buffered']
    #allocation21 [shape = 'u8[4096]{0}', space=vmem, size = 0x1000, scoped, tag = 'output window, operand 1, single buffered']
    #allocation22 [shape = 's32[1]{0}', space=sflag, size = 0x4, scoped, tag = 'scoped memory for tpu_custom_call.1']
    %23 = vsyncpa [#allocation3], 0
    %24 = vsyncpa [#allocation6], 0
    %25 = vsyncpa [#allocation9], 0
    %26 = vsyncpa [#allocation12], 0
    %27 = vsyncpa [#allocation15], 0
    %28 = vsyncpa [#allocation18], 0
    %29 = vsyncpa [#allocation4], 0
    %30 = vsyncpa [#allocation22], 0
    // Predicated region
    $region2: #{tpu_custom_call.1} parent=1 // pred_check
      _
    $region3: #{tpu_custom_call.1} parent=1 // pred_check_branch
      %32 = sbr.rel (0) target = $region5
    $region4: #{tpu_custom_call.1} parent=1 // pred_region
      %s34 = ssub.s32 128, 128
      %35 = vsyncadd [#allocation3], %s34
      %s37 = sshll.u32 [#allocation2], 4
      %s38 = int_to_ptr.vmem [resolvable:$true] %s37
      %40 = dma.hbm_to_vmem [thread:$0]  %s0, 128, %s38, [#allocation3]
    $region5: #{tpu_custom_call.1} parent=1 // pred_fallthru
      _
    // Predicated region
    $region6: #{tpu_custom_call.1} parent=1 // pred_check
      _
    $region7: #{tpu_custom_call.1} parent=1 // pred_check_branch
      %42 = sbr.rel (0) target = $region9
    $region8: #{tpu_custom_call.1} parent=1 // pred_region
      %s44 = ssub.s32 128, 128
      %45 = vsyncadd [#allocation6], %s44
      %s47 = sshll.u32 [#allocation5], 4
      %s48 = int_to_ptr.vmem [resolvable:$true] %s47
      %50 = dma.hbm_to_vmem [thread:$0]  %s1, 128, %s48, [#allocation6]
    $region9: #{tpu_custom_call.1} parent=1 // pred_fallthru
      _
    // Predicated region
    $region10: #{tpu_custom_call.1} parent=1 // pred_check
      _
    $region11: #{tpu_custom_call.1} parent=1 // pred_check_branch
      %52 = sbr.rel (0) target = $region13
    $region12: #{tpu_custom_call.1} parent=1 // pred_region
      %s54 = ssub.s32 128, 128
      %55 = vsyncadd [#allocation6], %s54
      %s56 = sshll.u32 [#allocation7], 4
      %s57 = int_to_ptr.vmem [resolvable:$true] %s56
      %62 = dma.hbm_to_vmem [thread:$0]  %s2, 128, %s57, [#allocation6], 64, 64, 4
    $region13: #{tpu_custom_call.1} parent=1 // pred_fallthru
      _
    // Predicated region
    $region14: #{tpu_custom_call.1} parent=1 // pred_check
      _
    $region15: #{tpu_custom_call.1} parent=1 // pred_check_branch
      %64 = sbr.rel (0) target = $region17
    $region16: #{tpu_custom_call.1} parent=1 // pred_region
      _
    $region17: #{tpu_custom_call.1} parent=1 // pred_fallthru
      _
    // Predicated region
    $region18: #{tpu_custom_call.1} parent=1 // pred_check
      _
    $region19: #{tpu_custom_call.1} parent=1 // pred_check_branch
      %66 = sbr.rel (0) target = $region21
    $region20: #{tpu_custom_call.1} parent=1 // pred_region
      %s68 = ssub.s32 256, 256
      %69 = vsyncadd [#allocation9], %s68
      %s70 = sshll.u32 [#allocation8], 4
      %s71 = int_to_ptr.vmem [resolvable:$true] %s70
      %76 = dma.hbm_to_vmem [thread:$0]  %s4, 256, %s71, [#allocation9], 64, 64, 4
    $region21: #{tpu_custom_call.1} parent=1 // pred_fallthru
      _
    // Predicated region
    $region22: #{tpu_custom_call.1} parent=1 // pred_check
      _
    $region23: #{tpu_custom_call.1} parent=1 // pred_check_branch
      %78 = sbr.rel (0) target = $region25
    $region24: #{tpu_custom_call.1} parent=1 // pred_region
      _
    $region25: #{tpu_custom_call.1} parent=1 // pred_fallthru
      _
    // Predicated region
    $region26: #{tpu_custom_call.1} parent=1 // pred_check
      _
    $region27: #{tpu_custom_call.1} parent=1 // pred_check_branch
      %80 = sbr.rel (0) target = $region29
    $region28: #{tpu_custom_call.1} parent=1 // pred_region
      %s82 = ssub.s32 16, 16
      %83 = vsyncadd [#allocation9], %s82
      %s85 = sshll.u32 [#allocation10], 4
      %s86 = int_to_ptr.vmem [resolvable:$true] %s85
      %88 = dma.hbm_to_vmem [thread:$0]  %s6, 16, %s86, [#allocation9]
    $region29: #{tpu_custom_call.1} parent=1 // pred_fallthru
      _
    // Predicated region
    $region30: #{tpu_custom_call.1} parent=1 // pred_check
      _
    $region31: #{tpu_custom_call.1} parent=1 // pred_check_branch
      %90 = sbr.rel (0) target = $region33
    $region32: #{tpu_custom_call.1} parent=1 // pred_region
      %s92 = ssub.s32 16, 16
      %93 = vsyncadd [#allocation12], %s92
      %s95 = sshll.u32 [#allocation11], 4
      %s96 = int_to_ptr.vmem [resolvable:$true] %s95
      %98 = dma.hbm_to_vmem [thread:$0]  %s7, 16, %s96, [#allocation12]
    $region33: #{tpu_custom_call.1} parent=1 // pred_fallthru
      _
    // Predicated region
    $region34: #{tpu_custom_call.1} parent=1 // pred_check
      _
    $region35: #{tpu_custom_call.1} parent=1 // pred_check_branch
      %100 = sbr.rel (0) target = $region37
    $region36: #{tpu_custom_call.1} parent=1 // pred_region
      %s102 = ssub.s32 16, 16
      %103 = vsyncadd [#allocation12], %s102
      %s105 = sshll.u32 [#allocation13], 4
      %s106 = int_to_ptr.vmem [resolvable:$true] %s105
      %108 = dma.hbm_to_vmem [thread:$0]  %s8, 16, %s106, [#allocation12]
    $region37: #{tpu_custom_call.1} parent=1 // pred_fallthru
      _
    // Predicated region
    $region38: #{tpu_custom_call.1} parent=1 // pred_check
      _
    $region39: #{tpu_custom_call.1} parent=1 // pred_check_branch
      %110 = sbr.rel (0) target = $region41
    $region40: #{tpu_custom_call.1} parent=1 // pred_region
      _
    $region41: #{tpu_custom_call.1} parent=1 // pred_fallthru
      _
    // Predicated region
    $region42: #{tpu_custom_call.1} parent=1 // pred_check
      _
    $region43: #{tpu_custom_call.1} parent=1 // pred_check_branch
      %112 = sbr.rel (0) target = $region45
    $region44: #{tpu_custom_call.1} parent=1 // pred_region
      %s114 = ssub.s32 256, 256
      %115 = vsyncadd [#allocation15], %s114
      %s116 = sshll.u32 [#allocation14], 4
      %s117 = int_to_ptr.vmem [resolvable:$true] %s116
      %122 = dma.hbm_to_vmem [thread:$0]  %s10, 256, %s117, [#allocation15], 64, 64, 4
    $region45: #{tpu_custom_call.1} parent=1 // pred_fallthru
      _
    // Predicated region
    $region46: #{tpu_custom_call.1} parent=1 // pred_check
      _
    $region47: #{tpu_custom_call.1} parent=1 // pred_check_branch
      %124 = sbr.rel (0) target = $region49
    $region48: #{tpu_custom_call.1} parent=1 // pred_region
      %s126 = ssub.s32 16, 16
      %127 = vsyncadd [#allocation15], %s126
      %s129 = sshll.u32 [#allocation16], 4
      %s130 = int_to_ptr.vmem [resolvable:$true] %s129
      %132 = dma.hbm_to_vmem [thread:$0]  %s11, 16, %s130, [#allocation15]
    $region49: #{tpu_custom_call.1} parent=1 // pred_fallthru
      _
    // Predicated region
    $region50: #{tpu_custom_call.1} parent=1 // pred_check
      _
    $region51: #{tpu_custom_call.1} parent=1 // pred_check_branch
      %134 = sbr.rel (0) target = $region53
    $region52: #{tpu_custom_call.1} parent=1 // pred_region
      %s136 = ssub.s32 16, 16
      %137 = vsyncadd [#allocation18], %s136
      %s139 = sshll.u32 [#allocation17], 4
      %s140 = int_to_ptr.vmem [resolvable:$true] %s139
      %142 = dma.hbm_to_vmem [thread:$0]  %s12, 16, %s140, [#allocation18]
    $region53: #{tpu_custom_call.1} parent=1 // pred_fallthru
      _
    // Predicated region
    $region54: #{tpu_custom_call.1} parent=1 // pred_check
      _
    $region55: #{tpu_custom_call.1} parent=1 // pred_check_branch
      %144 = sbr.rel (0) target = $region57
    $region56: #{tpu_custom_call.1} parent=1 // pred_region
      %s146 = ssub.s32 16, 16
      %147 = vsyncadd [#allocation18], %s146
      %s149 = sshll.u32 [#allocation19], 4
      %s150 = int_to_ptr.vmem [resolvable:$true] %s149
      %152 = dma.hbm_to_vmem [thread:$0]  %s13, 16, %s150, [#allocation18]
    $region57: #{tpu_custom_call.1} parent=1 // pred_fallthru
      _
    // Predicated region
    $region58: #{tpu_custom_call.1} parent=1 // pred_check
      _
    $region59: #{tpu_custom_call.1} parent=1 // pred_check_branch
      %154 = sbr.rel (0) target = $region61
    $region60: #{tpu_custom_call.1} parent=1 // pred_region
      _
    $region61: #{tpu_custom_call.1} parent=1 // pred_fallthru
      _
    // Predicated region
    $region62: #{tpu_custom_call.1} parent=1 // pred_check
      _
    $region63: #{tpu_custom_call.1} parent=1 // pred_check_branch
      %156 = sbr.rel (0) target = $region65
    $region64: #{tpu_custom_call.1} parent=1 // pred_region
      _
    $region65: #{tpu_custom_call.1} parent=1 // pred_fallthru
      _
    // Predicated region
    $region66: #{tpu_custom_call.1} parent=1 // pred_check
      _
    $region67: #{tpu_custom_call.1} parent=1 // pred_check_branch
      %158 = sbr.rel (0) target = $region69
    $region68: #{tpu_custom_call.1} parent=1 // pred_region
      %159 = dma.done [#allocation3], 128
    $region69: #{tpu_custom_call.1} parent=1 // pred_fallthru
      _
    // Predicated region
    $region70: #{tpu_custom_call.1} parent=1 // pred_check
      _
    $region71: #{tpu_custom_call.1} parent=1 // pred_check_branch
      %161 = sbr.rel (0) target = $region73
    $region72: #{tpu_custom_call.1} parent=1 // pred_region
      %162 = dma.done [#allocation6], 128
    $region73: #{tpu_custom_call.1} parent=1 // pred_fallthru
      _
    // Predicated region
    $region74: #{tpu_custom_call.1} parent=1 // pred_check
      _
    $region75: #{tpu_custom_call.1} parent=1 // pred_check_branch
      %164 = sbr.rel (0) target = $region77
    $region76: #{tpu_custom_call.1} parent=1 // pred_region
      %165 = dma.done [#allocation6], 128
    $region77: #{tpu_custom_call.1} parent=1 // pred_fallthru
      _
    // Predicated region
    $region78: #{tpu_custom_call.1} parent=1 // pred_check
      _
    $region79: #{tpu_custom_call.1} parent=1 // pred_check_branch
      %167 = sbr.rel (0) target = $region81
    $region80: #{tpu_custom_call.1} parent=1 // pred_region
      %168 = dma.done [#allocation9], 256
    $region81: #{tpu_custom_call.1} parent=1 // pred_fallthru
      _
    // Predicated region
    $region82: #{tpu_custom_call.1} parent=1 // pred_check
      _
    $region83: #{tpu_custom_call.1} parent=1 // pred_check_branch
      %170 = sbr.rel (0) target = $region85
    $region84: #{tpu_custom_call.1} parent=1 // pred_region
      %171 = dma.done [#allocation9], 16
    $region85: #{tpu_custom_call.1} parent=1 // pred_fallthru
      _
    // Predicated region
    $region86: #{tpu_custom_call.1} parent=1 // pred_check
      _
    $region87: #{tpu_custom_call.1} parent=1 // pred_check_branch
      %173 = sbr.rel (0) target = $region89
    $region88: #{tpu_custom_call.1} parent=1 // pred_region
      %174 = dma.done [#allocation12], 16
    $region89: #{tpu_custom_call.1} parent=1 // pred_fallthru
      _
    // Predicated region
    $region90: #{tpu_custom_call.1} parent=1 // pred_check
      _
    $region91: #{tpu_custom_call.1} parent=1 // pred_check_branch
      %176 = sbr.rel (0) target = $region93
    $region92: #{tpu_custom_call.1} parent=1 // pred_region
      %177 = dma.done [#allocation12], 16
    $region93: #{tpu_custom_call.1} parent=1 // pred_fallthru
      _
    // Predicated region
    $region94: #{tpu_custom_call.1} parent=1 // pred_check
      _
    $region95: #{tpu_custom_call.1} parent=1 // pred_check_branch
      %179 = sbr.rel (0) target = $region97
    $region96: #{tpu_custom_call.1} parent=1 // pred_region
      %180 = dma.done [#allocation15], 256
    $region97: #{tpu_custom_call.1} parent=1 // pred_fallthru
      _
    // Predicated region
    $region98: #{tpu_custom_call.1} parent=1 // pred_check
      _
    $region99: #{tpu_custom_call.1} parent=1 // pred_check_branch
      %182 = sbr.rel (0) target = $region101
    $region100: #{tpu_custom_call.1} parent=1 // pred_region
      %183 = dma.done [#allocation15], 16
    $region101: #{tpu_custom_call.1} parent=1 // pred_fallthru
      _
    // Predicated region
    $region102: #{tpu_custom_call.1} parent=1 // pred_check
      _
    $region103: #{tpu_custom_call.1} parent=1 // pred_check_branch
      %185 = sbr.rel (0) target = $region105
    $region104: #{tpu_custom_call.1} parent=1 // pred_region
      %186 = dma.done [#allocation18], 16
    $region105: #{tpu_custom_call.1} parent=1 // pred_fallthru
      _
    // Predicated region
    $region106: #{tpu_custom_call.1} parent=1 // pred_check
      _
    $region107: #{tpu_custom_call.1} parent=1 // pred_check_branch
      %188 = sbr.rel (0) target = $region109
    $region108: #{tpu_custom_call.1} parent=1 // pred_region
      %189 = dma.done [#allocation18], 16
    $region109: #{tpu_custom_call.1} parent=1 // pred_fallthru
      _
    %v191 = vld [vmem:[#allocation2] sm:$0xff]
    %v192 = vpack.c.bf16 %v191, %v191
    %v193 = vld [vmem:[#allocation7] sm:$0xf]
    %v194 = vld [vmem:[#allocation7 + $0x4] sm:$0xf]
    %v195 = vld [vmem:[%s3] sm:$0x1]
    %v197 = vlaneseq
    %v198 = vshrl.u32 %v197, 7
    %v199 = vsub.s32 0, %v198
    %v200 = vrot.slane %v195, %v199
    %v204 = vunpack.c.l.b16 %v193
    %v205 = vunpack.c.l.b16 %v194
    %v206 = vpack.c.b16 %v205, %v204
    %vm208 = vcmask 130048
    %v210 = vsel %vm208, %v192, 0
    %212 = vmatprep.subr.bf16.mxu0 0
    %213 = vmatpush1.bf16.msra.mxu0 %v206
    %214 = vmatprep.subr.bf16.mxu0 0
    %215 = vmatpush1.bf16.msra.mxu0 0
    %216 = vmatprep.subr.bf16.mxu0 0
    %217 = vmatpush1.bf16.msra.mxu0 0
    %218 = vmatprep.subr.bf16.mxu0 0
    %219 = vmatpush1.bf16.msra.mxu0 0
    %220 = vmatprep.subr.bf16.mxu0 0
    %221 = vmatpush1.bf16.msra.mxu0 0
    %222 = vmatprep.subr.bf16.mxu0 0
    %223 = vmatpush1.bf16.msra.mxu0 0
    %224 = vmatprep.subr.bf16.mxu0 0
    %225 = vmatpush1.bf16.msra.mxu0 0
    %226 = vmatprep.subr.bf16.mxu0 0
    %227 = vmatpush1.bf16.msra.mxu0 0
    %228 = vmatprep.subr.bf16.mxu0 0
    %229 = vmatpush1.bf16.msra.mxu0 0
    %230 = vmatprep.subr.bf16.mxu0 0
    %231 = vmatpush1.bf16.msra.mxu0 0
    %232 = vmatprep.subr.bf16.mxu0 0
    %233 = vmatpush1.bf16.msra.mxu0 0
    %234 = vmatprep.subr.bf16.mxu0 0
    %235 = vmatpush1.bf16.msra.mxu0 0
    %236 = vmatprep.subr.bf16.mxu0 0
    %237 = vmatpush1.bf16.msra.mxu0 0
    %238 = vmatprep.subr.bf16.mxu0 0
    %239 = vmatpush1.bf16.msra.mxu0 0
    %240 = vmatprep.subr.bf16.mxu0 0
    %241 = vmatpush1.bf16.msra.mxu0 0
    %242 = vmatprep.subr.bf16.mxu0 0
    %243 = vmatpush1.bf16.msra.mxu0 0
    %244 = vmatprep.mubr.bf16.mxu0 0
    %245 = vmatmul.mubr.bf16.gmra.mrb[0].mxu0 %v210
    %v246 = vpop.f32.mrb[0].mxu0
    %v247 = vadd.f32 %v200, %v246
    %v248 = vpop.f32.mrb[0].mxu0
    %v249 = vpop.f32.mrb[0].mxu0
    %v250 = vpop.f32.mrb[0].mxu0
    %251 = vdwg.mxu0
    %v252 = vxor.u32 %v247, 2147483648
    %v253 = vmul.f32 %v252, 1.442695
    %v254 = vpow.pop %v253
    %v255 = vadd.f32 %v254, 1.0
    %v256 = vrcp.pop %v255
    %v257 = vmul.f32 1.0, %v256
    %v258 = vld [vmem:[#allocation5] sm:$0xff]
    %v259 = vpack.c.bf16 %v258, %v258
    %v260 = vld [vmem:[%s5] sm:$0xf]
    %v261 = vld [vmem:[%s5 + $0x4] sm:$0xf]
    %v262 = vld [vmem:[%s5 + $0x8] sm:$0xf]
    %v263 = vld [vmem:[%s5 + $0xc] sm:$0xf]
    %v268 = vunpack.c.l.b16 %v260
    %v269 = vunpack.c.l.b16 %v261
    %v270 = vunpack.c.l.b16 %v262
    %v271 = vunpack.c.l.b16 %v263
    %v272 = vpack.c.b16 %v269, %v268
    %v273 = vpack.c.b16 %v271, %v270
    %vm276 = vcmask 261120
    %v278 = vsel %vm276, %v259, 0
    %280 = vmatprep.subr.bf16.mxu0 0
    %281 = vmatpush1.bf16.msra.mxu0 %v272
    %282 = vmatprep.subr.bf16.mxu0 0
    %283 = vmatpush1.bf16.msra.mxu0 %v273
    %284 = vmatprep.subr.bf16.mxu0 0
    %285 = vmatpush1.bf16.msra.mxu0 0
    %286 = vmatprep.subr.bf16.mxu0 0
    %287 = vmatpush1.bf16.msra.mxu0 0
    %288 = vmatprep.subr.bf16.mxu0 0
    %289 = vmatpush1.bf16.msra.mxu0 0
    %290 = vmatprep.subr.bf16.mxu0 0
    %291 = vmatpush1.bf16.msra.mxu0 0
    %292 = vmatprep.subr.bf16.mxu0 0
    %293 = vmatpush1.bf16.msra.mxu0 0
    %294 = vmatprep.subr.bf16.mxu0 0
    %295 = vmatpush1.bf16.msra.mxu0 0
    %296 = vmatprep.subr.bf16.mxu0 0
    %297 = vmatpush1.bf16.msra.mxu0 0
    %298 = vmatprep.subr.bf16.mxu0 0
    %299 = vmatpush1.bf16.msra.mxu0 0
    %300 = vmatprep.subr.bf16.mxu0 0
    %301 = vmatpush1.bf16.msra.mxu0 0
    %302 = vmatprep.subr.bf16.mxu0 0
    %303 = vmatpush1.bf16.msra.mxu0 0
    %304 = vmatprep.subr.bf16.mxu0 0
    %305 = vmatpush1.bf16.msra.mxu0 0
    %306 = vmatprep.subr.bf16.mxu0 0
    %307 = vmatpush1.bf16.msra.mxu0 0
    %308 = vmatprep.subr.bf16.mxu0 0
    %309 = vmatpush1.bf16.msra.mxu0 0
    %310 = vmatprep.subr.bf16.mxu0 0
    %311 = vmatpush1.bf16.msra.mxu0 0
    %312 = vmatprep.mubr.bf16.mxu0 0
    %313 = vmatmul.mubr.bf16.gmra.mrb[0].mxu0 %v278
    %v314 = vpop.f32.mrb[0].mxu0
    %v315 = vadd.f32 0.0, %v314
    %v316 = vpop.f32.mrb[0].mxu0
    %v317 = vpop.f32.mrb[0].mxu0
    %v318 = vpop.f32.mrb[0].mxu0
    %319 = vdwg.mxu0
    %v320 = vpack.c.bf16 %v257, %v257
    %v321 = vld [vmem:[#allocation8] sm:$0xf]
    %v322 = vld [vmem:[#allocation8 + $0x4] sm:$0xf]
    %v323 = vld [vmem:[#allocation8 + $0x8] sm:$0xf]
    %v324 = vld [vmem:[#allocation8 + $0xc] sm:$0xf]
    %v329 = vunpack.c.l.b16 %v321
    %v330 = vunpack.c.l.b16 %v322
    %v331 = vunpack.c.l.b16 %v323
    %v332 = vunpack.c.l.b16 %v324
    %v333 = vpack.c.b16 %v330, %v329
    %v334 = vpack.c.b16 %v332, %v331
    %v338 = vsel %vm276, %v320, 0
    %340 = vmatprep.subr.bf16.mxu0 0
    %341 = vmatpush1.bf16.msra.mxu0 %v333
    %342 = vmatprep.subr.bf16.mxu0 0
    %343 = vmatpush1.bf16.msra.mxu0 %v334
    %344 = vmatprep.subr.bf16.mxu0 0
    %345 = vmatpush1.bf16.msra.mxu0 0
    %346 = vmatprep.subr.bf16.mxu0 0
    %347 = vmatpush1.bf16.msra.mxu0 0
    %348 = vmatprep.subr.bf16.mxu0 0
    %349 = vmatpush1.bf16.msra.mxu0 0
    %350 = vmatprep.subr.bf16.mxu0 0
    %351 = vmatpush1.bf16.msra.mxu0 0
    %352 = vmatprep.subr.bf16.mxu0 0
    %353 = vmatpush1.bf16.msra.mxu0 0
    %354 = vmatprep.subr.bf16.mxu0 0
    %355 = vmatpush1.bf16.msra.mxu0 0
    %356 = vmatprep.subr.bf16.mxu0 0
    %357 = vmatpush1.bf16.msra.mxu0 0
    %358 = vmatprep.subr.bf16.mxu0 0
    %359 = vmatpush1.bf16.msra.mxu0 0
    %360 = vmatprep.subr.bf16.mxu0 0
    %361 = vmatpush1.bf16.msra.mxu0 0
    %362 = vmatprep.subr.bf16.mxu0 0
    %363 = vmatpush1.bf16.msra.mxu0 0
    %364 = vmatprep.subr.bf16.mxu0 0
    %365 = vmatpush1.bf16.msra.mxu0 0
    %366 = vmatprep.subr.bf16.mxu0 0
    %367 = vmatpush1.bf16.msra.mxu0 0
    %368 = vmatprep.subr.bf16.mxu0 0
    %369 = vmatpush1.bf16.msra.mxu0 0
    %370 = vmatprep.subr.bf16.mxu0 0
    %371 = vmatpush1.bf16.msra.mxu0 0
    %372 = vmatprep.mubr.bf16.mxu0 0
    %373 = vmatmul.mubr.bf16.gmra.mrb[0].mxu0 %v338
    %v374 = vpop.f32.mrb[0].mxu0
    %v375 = vadd.f32 0.0, %v374
    %v376 = vpop.f32.mrb[0].mxu0
    %v377 = vpop.f32.mrb[0].mxu0
    %v378 = vpop.f32.mrb[0].mxu0
    %379 = vdwg.mxu0
    %v380 = vadd.f32 %v375, %v315
    %v381 = vld [vmem:[#allocation10] sm:$0x1]
    %v383 = vlaneseq
    %v384 = vshrl.u32 %v383, 7
    %v385 = vsub.s32 0, %v384
    %v386 = vrot.slane %v381, %v385
    %v388 = vadd.f32 %v380, %v386
    %v389 = vld [vmem:[#allocation11] sm:$0x1]
    %v391 = vlaneseq
    %v392 = vshrl.u32 %v391, 7
    %v393 = vsub.s32 0, %v392
    %v394 = vrot.slane %v389, %v393
    %395 = vrot.lane.b32.xlu0 %v394, 64
    %v396 = vpop.permute.xlu0 %395
    %v398 = vadd.f32 %v375, %v396
    %v399 = vxor.u32 %v388, 2147483648
    %v400 = vmul.f32 %v399, 1.442695
    %v401 = vpow.pop %v400
    %v402 = vadd.f32 %v401, 1.0
    %v403 = vrcp.pop %v402
    %v404 = vmul.f32 1.0, %v403
    %v405 = vld [vmem:[#allocation13] sm:$0x1]
    %v407 = vlaneseq
    %v408 = vshrl.u32 %v407, 7
    %v409 = vsub.s32 0, %v408
    %v410 = vrot.slane %v405, %v409
    %411 = vrot.lane.b32.xlu0 %v410, 64
    %v412 = vpop.permute.xlu0 %411
    %v414 = vadd.f32 %v315, %v412
    %416 = vrot.lane.b32.xlu0 %v414, 64
    %v417 = vpop.permute.xlu0 %416
    %v419 = vmul.f32 %v404, %v417
    %421 = vrot.lane.b32.xlu0 %v419, 64
    %v422 = vpop.permute.xlu0 %421
    %v424 = vadd.f32 %v398, %v422
    %v425 = vtanh.pop %v424
    %v426 = vsub.f32 1.0, %v404
    %428 = vrot.lane.b32.xlu0 %v425, 96
    %v429 = vpop.permute.xlu0 %428
    %v431 = vmul.f32 %v426, %v429
    %433 = vrot.lane.b32.xlu0 %v258, 32
    %v434 = vpop.permute.xlu0 %433
    %v436 = vmul.f32 %v404, %v434
    %v437 = vadd.f32 %v431, %v436
    %439 = vrot.lane.b32.xlu0 %v437, 96
    %v440 = vpop.permute.xlu0 %439
    %442 = vst.msk [vmem:[#allocation21] sm:$0xff] %vm276, %v440
    %v443 = vpack.c.bf16 %v437, %v437
    %v444 = vld [vmem:[#allocation14] sm:$0xf]
    %v445 = vld [vmem:[#allocation14 + $0x4] sm:$0xf]
    %v446 = vld [vmem:[#allocation14 + $0x8] sm:$0xf]
    %v447 = vld [vmem:[#allocation14 + $0xc] sm:$0xf]
    %449 = vrot.lane.b32.xlu0 %v443, 96
    %v450 = vpop.permute.xlu0 %449
    %v455 = vunpack.c.l.b16 %v444
    %v456 = vunpack.c.l.b16 %v445
    %v457 = vunpack.c.l.b16 %v446
    %v458 = vunpack.c.l.b16 %v447
    %v459 = vpack.c.b16 %v456, %v455
    %v460 = vpack.c.b16 %v458, %v457
    %v464 = vsel %vm276, %v450, 0
    %466 = vmatprep.subr.bf16.mxu0 0
    %467 = vmatpush1.bf16.msra.mxu0 %v459
    %468 = vmatprep.subr.bf16.mxu0 0
    %469 = vmatpush1.bf16.msra.mxu0 %v460
    %470 = vmatprep.subr.bf16.mxu0 0
    %471 = vmatpush1.bf16.msra.mxu0 0
    %472 = vmatprep.subr.bf16.mxu0 0
    %473 = vmatpush1.bf16.msra.mxu0 0
    %474 = vmatprep.subr.bf16.mxu0 0
    %475 = vmatpush1.bf16.msra.mxu0 0
    %476 = vmatprep.subr.bf16.mxu0 0
    %477 = vmatpush1.bf16.msra.mxu0 0
    %478 = vmatprep.subr.bf16.mxu0 0
    %479 = vmatpush1.bf16.msra.mxu0 0
    %480 = vmatprep.subr.bf16.mxu0 0
    %481 = vmatpush1.bf16.msra.mxu0 0
    %482 = vmatprep.subr.bf16.mxu0 0
    %483 = vmatpush1.bf16.msra.mxu0 0
    %484 = vmatprep.subr.bf16.mxu0 0
    %485 = vmatpush1.bf16.msra.mxu0 0
    %486 = vmatprep.subr.bf16.mxu0 0
    %487 = vmatpush1.bf16.msra.mxu0 0
    %488 = vmatprep.subr.bf16.mxu0 0
    %489 = vmatpush1.bf16.msra.mxu0 0
    %490 = vmatprep.subr.bf16.mxu0 0
    %491 = vmatpush1.bf16.msra.mxu0 0
    %492 = vmatprep.subr.bf16.mxu0 0
    %493 = vmatpush1.bf16.msra.mxu0 0
    %494 = vmatprep.subr.bf16.mxu0 0
    %495 = vmatpush1.bf16.msra.mxu0 0
    %496 = vmatprep.subr.bf16.mxu0 0
    %497 = vmatpush1.bf16.msra.mxu0 0
    %498 = vmatprep.mubr.bf16.mxu0 0
    %499 = vmatmul.mubr.bf16.gmra.mrb[0].mxu0 %v464
    %v500 = vpop.f32.mrb[0].mxu0
    %v501 = vadd.f32 0.0, %v500
    %v502 = vpop.f32.mrb[0].mxu0
    %v503 = vpop.f32.mrb[0].mxu0
    %v504 = vpop.f32.mrb[0].mxu0
    %505 = vdwg.mxu0
    %v506 = vld [vmem:[#allocation16] sm:$0x1]
    %v508 = vlaneseq
    %v509 = vshrl.u32 %v508, 7
    %v510 = vsub.s32 0, %v509
    %v511 = vrot.slane %v506, %v510
    %v513 = vadd.f32 %v501, %v511
    %v514 = vld [vmem:[#allocation17] sm:$0x1]
    %v515 = vxor.u32 %v513, 2147483648
    %v516 = vmul.f32 %v515, 1.442695
    %v517 = vpow.pop %v516
    %v518 = vadd.f32 %v517, 1.0
    %v519 = vrcp.pop %v518
    %v520 = vmul.f32 1.0, %v519
    %v521 = vld [vmem:[#allocation19] sm:$0x1]
    %v523 = vlaneseq
    %v524 = vshrl.u32 %v523, 7
    %v525 = vsub.s32 0, %v524
    %v526 = vrot.slane %v521, %v525
    %527 = vrot.lane.b32.xlu0 %v526, 64
    %v528 = vpop.permute.xlu0 %527
    %v530 = vadd.f32 %v501, %v528
    %532 = vrot.lane.b32.xlu0 %v530, 64
    %v533 = vpop.permute.xlu0 %532
    %v535 = vmul.f32 %v520, %v533
    %v537 = vlaneseq
    %v538 = vshrl.u32 %v537, 7
    %v539 = vsub.s32 0, %v538
    %v540 = vrot.slane %v514, %v539
    %v542 = vadd.f32 %v540, %v535
    %v543 = vtanh.pop %v542
    %v544 = vsub.f32 1.0, %v520
    %546 = vrot.lane.b32.xlu0 %v543, 32
    %v547 = vpop.permute.xlu0 %546
    %v549 = vmul.f32 %v544, %v547
    %v550 = vmul.f32 %v520, %v437
    %v551 = vadd.f32 %v549, %v550
    %v553 = vcombine.high %v551, %v551
    %vm555 = vcmask 519424
    %v556 = vsel %vm555, %v551, 0.0
    %v557 = vrot.slane %v556, 4
    %v558 = vadd.f32 %v556, %v557
    %v559 = vrot.slane %v558, 2
    %v560 = vadd.f32 %v558, %v559
    %v561 = vrot.slane %v560, 1
    %v562 = vadd.f32 %v560, %v561
    %v563 = vsel %vm555, %v553, 0.0
    %v564 = vrot.slane %v563, 4
    %v565 = vadd.f32 %v563, %v564
    %v566 = vrot.slane %v565, 2
    %v567 = vadd.f32 %v565, %v566
    %v568 = vrot.slane %v567, 1
    %v569 = vadd.f32 %v567, %v568
    %v570 = vsub.f32 %v562, %v551
    %v571 = vsub.f32 %v569, %v553
    %v572 = vmul.f32 %v570, 0.25
    %v573 = vmul.f32 %v571, 0.25
    %v574 = vpack.c.bf16 %v551, %v551
    %576 = vrot.lane.b32.xlu0 %v574, 96
    %v577 = vpop.permute.xlu0 %576
    %v579 = vsel %vm276, %v577, 0
    %581 = vmatprep.subr.bf16.mxu0 0
    %582 = vmatpush1.bf16.msra.mxu0 %v459
    %583 = vmatprep.subr.bf16.mxu0 0
    %584 = vmatpush1.bf16.msra.mxu0 %v460
    %585 = vmatprep.subr.bf16.mxu0 0
    %586 = vmatpush1.bf16.msra.mxu0 0
    %587 = vmatprep.subr.bf16.mxu0 0
    %588 = vmatpush1.bf16.msra.mxu0 0
    %589 = vmatprep.subr.bf16.mxu0 0
    %590 = vmatpush1.bf16.msra.mxu0 0
    %591 = vmatprep.subr.bf16.mxu0 0
    %592 = vmatpush1.bf16.msra.mxu0 0
    %593 = vmatprep.subr.bf16.mxu0 0
    %594 = vmatpush1.bf16.msra.mxu0 0
    %595 = vmatprep.subr.bf16.mxu0 0
    %596 = vmatpush1.bf16.msra.mxu0 0
    %597 = vmatprep.subr.bf16.mxu0 0
    %598 = vmatpush1.bf16.msra.mxu0 0
    %599 = vmatprep.subr.bf16.mxu0 0
    %600 = vmatpush1.bf16.msra.mxu0 0
    %601 = vmatprep.subr.bf16.mxu0 0
    %602 = vmatpush1.bf16.msra.mxu0 0
    %603 = vmatprep.subr.bf16.mxu0 0
    %604 = vmatpush1.bf16.msra.mxu0 0
    %605 = vmatprep.subr.bf16.mxu0 0
    %606 = vmatpush1.bf16.msra.mxu0 0
    %607 = vmatprep.subr.bf16.mxu0 0
    %608 = vmatpush1.bf16.msra.mxu0 0
    %609 = vmatprep.subr.bf16.mxu0 0
    %610 = vmatpush1.bf16.msra.mxu0 0
    %611 = vmatprep.subr.bf16.mxu0 0
    %612 = vmatpush1.bf16.msra.mxu0 0
    %613 = vmatprep.mubr.bf16.mxu0 0
    %614 = vmatmul.mubr.bf16.gmra.mrb[0].mxu0 %v579
    %v615 = vpop.f32.mrb[0].mxu0
    %v616 = vadd.f32 0.0, %v615
    %v617 = vpop.f32.mrb[0].mxu0
    %v618 = vpop.f32.mrb[0].mxu0
    %v619 = vpop.f32.mrb[0].mxu0
    %620 = vdwg.mxu0
    %v623 = vcombine.low %v572, %v573
    %v625 = vpack.c.bf16 %v623, %v623
    %v626 = vld [vmem:[%s9] sm:$0xf]
    %v627 = vld [vmem:[%s9 + $0x4] sm:$0xf]
    %v628 = vld [vmem:[%s9 + $0x8] sm:$0xf]
    %v629 = vld [vmem:[%s9 + $0xc] sm:$0xf]
    %631 = vrot.lane.b32.xlu0 %v625, 96
    %v632 = vpop.permute.xlu0 %631
    %v637 = vunpack.c.l.b16 %v626
    %v638 = vunpack.c.l.b16 %v627
    %v639 = vunpack.c.l.b16 %v628
    %v640 = vunpack.c.l.b16 %v629
    %v641 = vpack.c.b16 %v638, %v637
    %v642 = vpack.c.b16 %v640, %v639
    %v646 = vsel %vm276, %v632, 0
    %648 = vmatprep.subr.bf16.mxu0 0
    %649 = vmatpush1.bf16.msra.mxu0 %v641
    %650 = vmatprep.subr.bf16.mxu0 0
    %651 = vmatpush1.bf16.msra.mxu0 %v642
    %652 = vmatprep.subr.bf16.mxu0 0
    %653 = vmatpush1.bf16.msra.mxu0 0
    %654 = vmatprep.subr.bf16.mxu0 0
    %655 = vmatpush1.bf16.msra.mxu0 0
    %656 = vmatprep.subr.bf16.mxu0 0
    %657 = vmatpush1.bf16.msra.mxu0 0
    %658 = vmatprep.subr.bf16.mxu0 0
    %659 = vmatpush1.bf16.msra.mxu0 0
    %660 = vmatprep.subr.bf16.mxu0 0
    %661 = vmatpush1.bf16.msra.mxu0 0
    %662 = vmatprep.subr.bf16.mxu0 0
    %663 = vmatpush1.bf16.msra.mxu0 0
    %664 = vmatprep.subr.bf16.mxu0 0
    %665 = vmatpush1.bf16.msra.mxu0 0
    %666 = vmatprep.subr.bf16.mxu0 0
    %667 = vmatpush1.bf16.msra.mxu0 0
    %668 = vmatprep.subr.bf16.mxu0 0
    %669 = vmatpush1.bf16.msra.mxu0 0
    %670 = vmatprep.subr.bf16.mxu0 0
    %671 = vmatpush1.bf16.msra.mxu0 0
    %672 = vmatprep.subr.bf16.mxu0 0
    %673 = vmatpush1.bf16.msra.mxu0 0
    %674 = vmatprep.subr.bf16.mxu0 0
    %675 = vmatpush1.bf16.msra.mxu0 0
    %676 = vmatprep.subr.bf16.mxu0 0
    %677 = vmatpush1.bf16.msra.mxu0 0
    %678 = vmatprep.subr.bf16.mxu0 0
    %679 = vmatpush1.bf16.msra.mxu0 0
    %680 = vmatprep.mubr.bf16.mxu0 0
    %681 = vmatmul.mubr.bf16.gmra.mrb[0].mxu0 %v646
    %v682 = vpop.f32.mrb[0].mxu0
    %v683 = vadd.f32 0.0, %v682
    %v684 = vpop.f32.mrb[0].mxu0
    %v685 = vpop.f32.mrb[0].mxu0
    %v686 = vpop.f32.mrb[0].mxu0
    %687 = vdwg.mxu0
    %v688 = vadd.f32 %v683, %v616
    %v689 = vadd.f32 %v688, %v511
    %690 = vrot.lane.b32.xlu0 %v540, 64
    %v691 = vpop.permute.xlu0 %690
    %v693 = vadd.f32 %v683, %v691
    %v694 = vxor.u32 %v689, 2147483648
    %v695 = vmul.f32 %v694, 1.442695
    %v696 = vpow.pop %v695
    %v697 = vadd.f32 %v696, 1.0
    %v698 = vrcp.pop %v697
    %v699 = vmul.f32 1.0, %v698
    %v700 = vadd.f32 %v616, %v528
    %702 = vrot.lane.b32.xlu0 %v700, 64
    %v703 = vpop.permute.xlu0 %702
    %v705 = vmul.f32 %v699, %v703
    %707 = vrot.lane.b32.xlu0 %v705, 64
    %v708 = vpop.permute.xlu0 %707
    %v710 = vadd.f32 %v693, %v708
    %v711 = vtanh.pop %v710
    %v712 = vsub.f32 1.0, %v699
    %714 = vrot.lane.b32.xlu0 %v711, 96
    %v715 = vpop.permute.xlu0 %714
    %v717 = vmul.f32 %v712, %v715
    %v718 = vmul.f32 %v699, %v551
    %v719 = vadd.f32 %v717, %v718
    %v720 = vpack.c.bf16 %v719, %v719
    %v721 = vld [vmem:[%s14] sm:$0xf]
    %v722 = vld [vmem:[%s14 + $0x4] sm:$0xf]
    %v723 = vld [vmem:[%s14 + $0x8] sm:$0xf]
    %v724 = vld [vmem:[%s14 + $0xc] sm:$0xf]
    %v725 = vld [vmem:[%s15] sm:$0x1]
    %v727 = vlaneseq
    %v728 = vshrl.u32 %v727, 7
    %v729 = vsub.s32 0, %v728
    %v730 = vrot.slane %v725, %v729
    %733 = vrot.lane.b32.xlu0 %v720, 96
    %v734 = vpop.permute.xlu0 %733
    %v739 = vunpack.c.l.b16 %v721
    %v740 = vunpack.c.l.b16 %v722
    %v741 = vunpack.c.l.b16 %v723
    %v742 = vunpack.c.l.b16 %v724
    %v743 = vpack.c.b16 %v740, %v739
    %v744 = vpack.c.b16 %v742, %v741
    %v748 = vsel %vm276, %v734, 0
    %750 = vmatprep.subr.bf16.mxu0 0
    %751 = vmatpush1.bf16.msra.mxu0 %v743
    %752 = vmatprep.subr.bf16.mxu0 0
    %753 = vmatpush1.bf16.msra.mxu0 %v744
    %754 = vmatprep.subr.bf16.mxu0 0
    %755 = vmatpush1.bf16.msra.mxu0 0
    %756 = vmatprep.subr.bf16.mxu0 0
    %757 = vmatpush1.bf16.msra.mxu0 0
    %758 = vmatprep.subr.bf16.mxu0 0
    %759 = vmatpush1.bf16.msra.mxu0 0
    %760 = vmatprep.subr.bf16.mxu0 0
    %761 = vmatpush1.bf16.msra.mxu0 0
    %762 = vmatprep.subr.bf16.mxu0 0
    %763 = vmatpush1.bf16.msra.mxu0 0
    %764 = vmatprep.subr.bf16.mxu0 0
    %765 = vmatpush1.bf16.msra.mxu0 0
    %766 = vmatprep.subr.bf16.mxu0 0
    %767 = vmatpush1.bf16.msra.mxu0 0
    %768 = vmatprep.subr.bf16.mxu0 0
    %769 = vmatpush1.bf16.msra.mxu0 0
    %770 = vmatprep.subr.bf16.mxu0 0
    %771 = vmatpush1.bf16.msra.mxu0 0
    %772 = vmatprep.subr.bf16.mxu0 0
    %773 = vmatpush1.bf16.msra.mxu0 0
    %774 = vmatprep.subr.bf16.mxu0 0
    %775 = vmatpush1.bf16.msra.mxu0 0
    %776 = vmatprep.subr.bf16.mxu0 0
    %777 = vmatpush1.bf16.msra.mxu0 0
    %778 = vmatprep.subr.bf16.mxu0 0
    %779 = vmatpush1.bf16.msra.mxu0 0
    %780 = vmatprep.subr.bf16.mxu0 0
    %781 = vmatpush1.bf16.msra.mxu0 0
    %782 = vmatprep.mubr.bf16.mxu0 0
    %783 = vmatmul.mubr.bf16.gmra.mrb[0].mxu0 %v748
    %v784 = vpop.f32.mrb[0].mxu0
    %v785 = vadd.f32 %v730, %v784
    %v786 = vpop.f32.mrb[0].mxu0
    %v787 = vpop.f32.mrb[0].mxu0
    %v788 = vpop.f32.mrb[0].mxu0
    %789 = vdwg.mxu0
    %790 = vst [vmem:[#allocation20] sm:$0xff] %v785
    // Predicated region
    $region110: #{tpu_custom_call.1} parent=1 // pred_check
      _
    $region111: #{tpu_custom_call.1} parent=1 // pred_check_branch
      %792 = sbr.rel (0) target = $region113
    $region112: #{tpu_custom_call.1} parent=1 // pred_region
      %s794 = ssub.s32 128, 128
      %795 = vsyncadd [#allocation4], %s794
      %s797 = sshll.u32 [#allocation20], 4
      %s798 = int_to_ptr.vmem [resolvable:$true] %s797
      %800 = dma.vmem_to_hbm [thread:$0]  %s798, 128, %s16, [#allocation4]
    $region113: #{tpu_custom_call.1} parent=1 // pred_fallthru
      _
    // Predicated region
    $region114: #{tpu_custom_call.1} parent=1 // pred_check
      _
    $region115: #{tpu_custom_call.1} parent=1 // pred_check_branch
      %802 = sbr.rel (0) target = $region117
    $region116: #{tpu_custom_call.1} parent=1 // pred_region
      %s804 = ssub.s32 128, 128
      %805 = vsyncadd [#allocation22], %s804
      %s807 = sshll.u32 [#allocation21], 4
      %s808 = int_to_ptr.vmem [resolvable:$true] %s807
      %810 = dma.vmem_to_hbm [thread:$0]  %s808, 128, %s17, [#allocation22]
    $region117: #{tpu_custom_call.1} parent=1 // pred_fallthru
      _
    // Predicated region
    $region118: #{tpu_custom_call.1} parent=1 // pred_check
      _
    $region119: #{tpu_custom_call.1} parent=1 // pred_check_branch
      %812 = sbr.rel (0) target = $region121
    $region120: #{tpu_custom_call.1} parent=1 // pred_region
      %813 = dma.done [#allocation4], 128
    $region121: #{tpu_custom_call.1} parent=1 // pred_fallthru
      _
    // Predicated region
    $region122: #{tpu_custom_call.1} parent=1 // pred_check
      _
    $region123: #{tpu_custom_call.1} parent=1 // pred_check_branch
      %815 = sbr.rel (0) target = $region125
    $region124: #{tpu_custom_call.1} parent=1 // pred_region
      %816 = dma.done [#allocation22], 128
    $region125: #{tpu_custom_call.1} parent=1 // pred_fallthru
      _
    %817 = vsyncpa [#allocation3], 1
    %818 = vsyncpa [#allocation6], 1
    %819 = vsyncpa [#allocation9], 1
    %820 = vsyncpa [#allocation12], 1
    %821 = vsyncpa [#allocation15], 1
    %822 = vsyncpa [#allocation18], 1
    %823 = vsyncpa [#allocation4], 1
    %824 = vsyncpa [#allocation22], 1

</llo_original>
